<compile_context>
chip_gen: v7x
topology: tpu7x:2x2x1
jax: 0.10.0
libtpu: 0.0.40
codegen_flags: <defaults>
</compile_context>

<pallas_src>
import jax
import jax.numpy as jnp
from jax.experimental import pallas as pl
from jax.experimental.pallas import tpu as pltpu

EPS = 1e-8  # matches torch.cosine_similarity default eps


def _round_up(x, m):
    return ((x + m - 1) // m) * m


def _vmem_capacity_bytes():
    try:
        return int(pltpu.get_tpu_info().vmem_capacity_bytes)
    except Exception:
        return 64 << 20  # conservative per-core default (v7x-sized)


def _tpu_num_cores():
    """Best-effort TensorCores-per-chip (megacore) detection."""
    try:
        kind = jax.devices()[0].device_kind.lower()
    except Exception:
        return 1
    if ("v7" in kind) or ("7x" in kind) or ("v4" in kind) or ("v5p" in kind):
        return 2  # megacore: 2 TensorCores share the grid
    return 1      # v5e / v6e: single TensorCore


# ---------------------------------------------------------------------------
# Kernel 1: stand-in RetrievalNet (global avg pool + linear proj), with the
# query L2-normalization fused so the cosine kernel needs no norm work.
# (Off the hot path; kept in Pallas as the backbone stand-in.)
# ---------------------------------------------------------------------------
def _feature_kernel(img_ref, w_ref, f_ref):
    # img_ref: (C, H*W)   w_ref: (C, D)   f_ref: (1, D)  (normalized query)
    img = img_ref[...].astype(jnp.float32)
    pooled = jnp.mean(img, axis=-1, keepdims=True)               # (C, 1)
    f = jax.lax.dot_general(                                     # contract C
        pooled, w_ref[...].astype(jnp.float32),
        dimension_numbers=(((0,), (0,)), ((), ())),
        preferred_element_type=jnp.float32)                      # (1, D)
    ss = jnp.sum(f * f, axis=-1, keepdims=True)                  # (1, 1)
    inv = jax.lax.rsqrt(jnp.maximum(ss, EPS * EPS))              # 1/max(||f||,eps)
    f_ref[...] = f * inv


def extract_feature(image_nchw, proj_w):
    """image_nchw: (1, C, H, W) float32; proj_w: (C, D) -> (1, D) unit-norm."""
    _, C, H, W = image_nchw.shape
    D = proj_w.shape[1]
    img2d = image_nchw.reshape(C, H * W)
    return pl.pallas_call(
        _feature_kernel,
        out_shape=jax.ShapeDtypeStruct((1, D), jnp.float32),
        grid=(1,),
        in_specs=[
            pl.BlockSpec((C, H * W), lambda i: (0, 0)),
            pl.BlockSpec((C, D), lambda i: (0, 0)),
        ],
        out_specs=pl.BlockSpec((1, D), lambda i: (0, 0)),
    )(img2d, proj_w)


# ---------------------------------------------------------------------------
# Kernel 2: cosine similarity of unit query fhat (1, D) vs unit database.
# Streaming MXU contraction over D, per-row dequant scale folded in after the
# dot, lane-dense (1, tile_n) output.
# ---------------------------------------------------------------------------
def _cosine_kernel(f_ref, y_ref, s_ref, out_ref):
    # f_ref: (1, D) bf16 unit query
    # y_ref: (TN, D) int8 (quantized) or bf16 unit-norm db rows
    # s_ref: (1, TN) f32 per-row dequant scale (ones for bf16 path)
    # out_ref: (1, TN) f32 cosine similarities (lane-dense)
    y = y_ref[...]
    if y.dtype != jnp.bfloat16:
        # int8 -> bf16 on the VPU; the per-row scale is applied to the dot
        # output instead of the (TN, D) tile (dot is linear in each row).
        y = y.astype(jnp.float32).astype(jnp.bfloat16)
    acc = jax.lax.dot_general(
        f_ref[...], y,
        dimension_numbers=(((1,), (1,)), ((), ())),
        preferred_element_type=jnp.float32)                      # (1, TN)
    out_ref[...] = acc * s_ref[...]


def prepare_db(db_feathers, db_dtype=jnp.int8):
    """One-time database preprocessing (amortized over all queries).

    * L2-normalize every row so the sweep kernel does no norm work.
    * Compress rows for the HBM-bound sweep:
        - int8 + per-row scale (default): halves HBM bytes vs bf16; dequant is
          a VPU convert so it runs on every generation (incl. v7x, no int MXU),
        - bf16 (db_dtype=jnp.bfloat16): full bf16 fidelity, scale = 1.
    Returns (db_q (N, D), db_scale (1, N) f32).
    """
    x = db_feathers.astype(jnp.float32)
    norm = jnp.sqrt(jnp.sum(x * x, axis=-1, keepdims=True))
    xhat = x / jnp.maximum(norm, EPS)
    n = x.shape[0]
    if jnp.dtype(db_dtype) == jnp.int8:
        amax = jnp.maximum(jnp.max(jnp.abs(xhat), axis=-1, keepdims=True), 1e-12)
        q = jnp.clip(jnp.round(xhat * (127.0 / amax)), -127.0, 127.0)
        db_q = q.astype(jnp.int8)
        db_scale = (amax / 127.0).astype(jnp.float32).reshape(1, n)
    else:
        db_q = xhat.astype(db_dtype)
        db_scale = jnp.ones((1, n), jnp.float32)
    return db_q, db_scale


def _choose_tile_n(n, d, itemsize, num_cores, vmem_cap):
    # Big blocks: amortize the ~0.35 us/grid-step overhead and keep the HBM
    # stream saturated.  Target multi-MiB db blocks but keep the
    # double-buffered stream well inside this generation's VMEM
    # (v7x: 64 MiB physical; v5e/v6e: 128 MiB).
    stream_budget = min(24 << 20, max(vmem_cap // 3, 4 << 20))
    per_block = stream_budget // 2                            # double-buffered
    cap_rows = max(128, (per_block // max(d * itemsize, 1)) // 128 * 128)
    cap_rows = min(cap_rows, 32768)
    # Megacore parts want >= 2 grid steps per TensorCore for load balance;
    # single-core parts should not split a small db (pure step overhead).
    min_steps = 2 * num_cores if num_cores > 1 else 1
    per_step_rows = _round_up(max(1, -(-n // min_steps)), 128)
    tile = min(cap_rows, per_step_rows, _round_up(n, 128))
    return max(128, tile)


def cosine_similarity_all(fhat, db_q, db_scale):
    """fhat: (1, D) unit-norm f32 query; db_q/db_scale from prepare_db.

    Returns sims (N,) f32.
    """
    N, D = db_q.shape
    itemsize = jnp.dtype(db_q.dtype).itemsize
    num_cores = _tpu_num_cores()
    vmem_cap = _vmem_capacity_bytes()
    tile_n = _choose_tile_n(N, D, itemsize, num_cores, vmem_cap)
    n_pad = _round_up(N, tile_n)
    if n_pad != N:
        # pad with zero rows / zero scales; their sims are 0 and sliced off
        db_q = jnp.pad(db_q, ((0, n_pad - N), (0, 0)))
        db_scale = jnp.pad(db_scale, ((0, 0), (0, n_pad - N)))
    f = fhat.astype(jnp.bfloat16)

    # Explicit per-generation VMEM budget: double-buffered db tile + scale +
    # output + query blocks, plus headroom; never exceed (capacity - 8 MiB).
    need = 2 * (tile_n * D * itemsize + tile_n * 4 + tile_n * 4 + D * 2)
    vmem_limit = int(min(max(need + (4 << 20), 16 << 20),
                         max(vmem_cap - (8 << 20), 16 << 20)))

    sims = pl.pallas_call(
        _cosine_kernel,
        out_shape=jax.ShapeDtypeStruct((1, n_pad), jnp.float32),
        grid=(n_pad // tile_n,),
        in_specs=[
            pl.BlockSpec((1, D), lambda i: (0, 0)),
            # Row-major (tile_n, D) db blocks => fully contiguous DMA; the
            # (((1,),(1,))) contraction is the native QK^T MXU pattern, so no
            # in-kernel transpose is emitted.  If xprof shows exposed DMA on
            # v5e, add pipeline_mode=pl.Buffered(3) here.
            pl.BlockSpec((tile_n, D), lambda i: (i, 0)),
            pl.BlockSpec((1, tile_n), lambda i: (0, i)),
        ],
        out_specs=pl.BlockSpec((1, tile_n), lambda i: (0, i)),   # lane-dense
        compiler_params=pltpu.CompilerParams(
            dimension_semantics=("parallel",),
            vmem_limit_bytes=vmem_limit),
    )(f, db_q, db_scale)
    return sims[0, :N]


# ---------------------------------------------------------------------------
# SearchNet.forward equivalent
# ---------------------------------------------------------------------------
def search_net_forward(image_chw, proj_w, db_q, db_scale, db_ids, top_num=100):
    """image_chw: (C, H, W); (db_q, db_scale) from prepare_db.

    Returns (top_ids, top_sims) sorted descending by similarity.
    """
    x = image_chw[None, ...]                       # unsqueeze(0) -> (1,C,H,W)
    fhat = extract_feature(x, proj_w)              # (1, D), already unit-norm
    sims = cosine_similarity_all(fhat, db_q, db_scale)   # (N,)
    k = min(top_num, int(sims.shape[0]))
    # ranking: equivalent to python result.sort(reverse=True)[:top_num]
    top_vals, top_idx = jax.lax.top_k(sims, k)
    top_ids = db_ids[top_idx]
    return top_ids, top_vals


# TODO(synk): tqdm progress bar, print() side effects, and loading the real
# pretrained RetrievalNet / precomputed ImageSet from disk have no Pallas
# equivalent; weights and database features are synthesized deterministically.

if __name__ == "__main__":
    key = jax.random.PRNGKey(0)
    k_img, k_w, k_db = jax.random.split(key, 3)

    C, H, W = 4, 16, 16     # input image (CHW, batch added by unsqueeze)
    D = 128                 # feature (feather) dimension
    N = 300                 # database size (deliberately not a tile multiple)
    TOP = 100

    image = jax.random.normal(k_img, (C, H, W), dtype=jnp.float32)
    proj_w = jax.random.normal(k_w, (C, D), dtype=jnp.float32) * 0.1
    db_feathers = jax.random.normal(k_db, (N, D), dtype=jnp.float32)
    db_ids = jnp.arange(N, dtype=jnp.int32)

    # one-time database preprocessing (normalize + int8 compaction + scales)
    db_q, db_scale = prepare_db(db_feathers)

    top_ids, top_sims = search_net_forward(image, proj_w, db_q, db_scale,
                                           db_ids, top_num=TOP)
    jax.block_until_ready((top_ids, top_sims))

    # sanity: shapes, descending order
    assert top_ids.shape == (TOP,) and top_sims.shape == (TOP,)
    assert bool(jnp.all(top_sims[:-1] >= top_sims[1:]))

    # correctness: kernel sims vs plain-XLA f32 cosine reference
    # (int8 db + bf16 query tolerance)
    fhat = extract_feature(image[None, ...], proj_w)
    sims = cosine_similarity_all(fhat, db_q, db_scale)
    xf = db_feathers.astype(jnp.float32)
    xf = xf / jnp.maximum(
        jnp.sqrt(jnp.sum(xf * xf, axis=-1, keepdims=True)), EPS)
    ref = xf @ fhat[0]
    assert float(jnp.max(jnp.abs(sims - ref))) < 5e-2

    print("KERNEL_OK")
</pallas_src>

<mosaic_0001>
module attributes {stable_mosaic.version = 11 : i64} {
  func.func @_feature_kernel(%arg0: i32, %arg1: memref<4x256xf32, #tpu.memory_space<vmem>>, %arg2: memref<4x128xf32, #tpu.memory_space<vmem>>, %arg3: memref<1x128xf32, #tpu.memory_space<vmem>>) attributes {dimension_semantics = [#tpu.dimension_semantics<arbitrary>], iteration_bounds = array<i64: 1>, scalar_prefetch = 0 : i64, scratch_operands = 0 : i64, tpu.core_type = #tpu.core_type<tc>, window_params = [{pipeline_mode = #tpu.pipeline_mode<synchronous>, transform_indices = @transform_0, window_bounds = array<i64: 4, 256>}, {pipeline_mode = #tpu.pipeline_mode<synchronous>, transform_indices = @transform_1, window_bounds = array<i64: 4, 128>}, {pipeline_mode = #tpu.pipeline_mode<synchronous>, transform_indices = @transform_2, window_bounds = array<i64: 1, 128>}]} {
    %c0 = arith.constant 0 : index
    %c0_0 = arith.constant 0 : index
    %0 = vector.load %arg1[%c0, %c0_0] : memref<4x256xf32, #tpu.memory_space<vmem>>, vector<4x256xf32>
    %cst = arith.constant dense<0.000000e+00> : vector<4xf32>
    %1 = vector.multi_reduction <add>, %0, %cst [1] : vector<4x256xf32> to vector<4xf32>
    %2 = vector.shape_cast %1 : vector<4xf32> to vector<4x1xf32>
    %cst_1 = arith.constant 2.560000e+02 : f32
    %3 = vector.broadcast %cst_1 : f32 to vector<4x1xf32>
    %4 = arith.divf %2, %3 : vector<4x1xf32>
    %c0_2 = arith.constant 0 : index
    %c0_3 = arith.constant 0 : index
    %5 = vector.load %arg2[%c0_2, %c0_3] : memref<4x128xf32, #tpu.memory_space<vmem>>, vector<4x128xf32>
    %cst_4 = arith.constant dense<0.000000e+00> : vector<1x128xf32>
    %6 = tpu.matmul %4, %5, %cst_4 {dimension_numbers = #tpu.dot_dimension_numbers<[0], [0], [1], [1], [0, 1, 1, 1], [], []>} : vector<4x1xf32>, vector<4x128xf32>, vector<1x128xf32> -> vector<1x128xf32>
    %7 = arith.mulf %6, %6 : vector<1x128xf32>
    %cst_5 = arith.constant dense<0.000000e+00> : vector<1xf32>
    %8 = vector.multi_reduction <add>, %7, %cst_5 [1] : vector<1x128xf32> to vector<1xf32>
    %9 = vector.shape_cast %8 : vector<1xf32> to vector<1x1xf32>
    %cst_6 = arith.constant 1.000000e-16 : f32
    %10 = vector.broadcast %cst_6 : f32 to vector<1x1xf32>
    %11 = arith.maximumf %9, %10 : vector<1x1xf32>
    %12 = math.rsqrt %11 : vector<1x1xf32>
    %13 = vector.broadcast %12 : vector<1x1xf32> to vector<1x128xf32>
    %14 = arith.mulf %6, %13 : vector<1x128xf32>
    %c0_7 = arith.constant 0 : index
    %c0_8 = arith.constant 0 : index
    %15 = vector.load %arg3[%c0_7, %c0_8] : memref<1x128xf32, #tpu.memory_space<vmem>>, vector<1x128xf32>
    tpu.vector_store %arg3[%c0_7, %c0_8], %14 {strides = array<i32>} : memref<1x128xf32, #tpu.memory_space<vmem>>, vector<1x128xf32>,
    return
  }
  func.func @transform_0(%arg0: i32) -> (i32, i32) {
    %c0_i32 = arith.constant 0 : i32
    %c0_i32_0 = arith.constant 0 : i32
    %c0_i32_1 = arith.constant 0 : i32
    return %c0_i32, %c0_i32_0 : i32, i32
  }
  func.func @transform_1(%arg0: i32) -> (i32, i32) {
    %c0_i32 = arith.constant 0 : i32
    %c0_i32_0 = arith.constant 0 : i32
    %c0_i32_1 = arith.constant 0 : i32
    return %c0_i32, %c0_i32_0 : i32, i32
  }
  func.func @transform_2(%arg0: i32) -> (i32, i32) {
    %c0_i32 = arith.constant 0 : i32
    %c0_i32_0 = arith.constant 0 : i32
    %c0_i32_1 = arith.constant 0 : i32
    return %c0_i32, %c0_i32_0 : i32, i32
  }
}

</mosaic_0001>

<llo_original>
// kernel: tpu_custom_call.1
$region0: #{tpu_custom_call.1}
  #allocation0 [shape = 'u32[]', space=smem, size = 0x4, offset = 0x4, fixed_abs, tag = 'smem constant byte address 0x4 - core index']
  #allocation1 [shape = 'u32[144,128]{1,0:T(1,128)}', space=vmem, size = 0x12000, scoped, tag = 'internal scratch']
  %s0 = inlined_call_operand.hbm [shape: f32[4,256], index: 0, kind: input, shape index: {}]
  %s1 = inlined_call_operand.hbm [shape: f32[4,128], index: 1, kind: input, shape index: {}]
  %s2 = inlined_call_operand.hbm [shape: f32[1,128], index: 2, kind: output, shape index: {}]
  %s3 = sld [smem:[#allocation0]]
  $region26: #{tpu_custom_call.1} parent=0
    _
  %s5 = ssub.s32 1, %s3
  %s6 = scalar_select 0, %s5, %s3
  $region1: #{tpu_custom_call.1} parent=0
    #allocation2 [shape = 'u8[4096]{0}', space=vmem, size = 0x1000, scoped, tag = 'input window, operand 0, single buffered']
    #allocation3 [shape = 's32[1]{0}', space=sflag, size = 0x4, scoped, tag = 'scoped memory for tpu_custom_call.1']
    #allocation4 [shape = 's32[1]{0}', space=sflag, size = 0x4, scoped, tag = 'scoped memory for tpu_custom_call.1']
    #allocation5 [shape = 'u8[2048]{0}', space=vmem, size = 0x800, scoped, tag = 'input window, operand 1, single buffered']
    #allocation6 [shape = 's32[1]{0}', space=sflag, size = 0x4, scoped, tag = 'scoped memory for tpu_custom_call.1']
    #allocation7 [shape = 'u8[512]{0}', space=vmem, size = 0x400, scoped, tag = 'output window, operand 0, single buffered']
    %7 = vsyncpa [#allocation3], 0
    %8 = vsyncpa [#allocation6], 0
    %9 = vsyncpa [#allocation4], 0
    // Predicated region
    $region2: #{tpu_custom_call.1} parent=1 // pred_check
      _
    $region3: #{tpu_custom_call.1} parent=1 // pred_check_branch
      %11 = sbr.rel (0) target = $region5
    $region4: #{tpu_custom_call.1} parent=1 // pred_region
      %s13 = ssub.s32 128, 128
      %14 = vsyncadd [#allocation3], %s13
      %s16 = sshll.u32 [#allocation2], 4
      %s17 = int_to_ptr.vmem [resolvable:$true] %s16
      %19 = dma.hbm_to_vmem [thread:$0]  %s0, 128, %s17, [#allocation3]
    $region5: #{tpu_custom_call.1} parent=1 // pred_fallthru
      _
    // Predicated region
    $region6: #{tpu_custom_call.1} parent=1 // pred_check
      _
    $region7: #{tpu_custom_call.1} parent=1 // pred_check_branch
      %21 = sbr.rel (0) target = $region9
    $region8: #{tpu_custom_call.1} parent=1 // pred_region
      %s23 = ssub.s32 64, 64
      %24 = vsyncadd [#allocation6], %s23
      %s26 = sshll.u32 [#allocation5], 4
      %s27 = int_to_ptr.vmem [resolvable:$true] %s26
      %29 = dma.hbm_to_vmem [thread:$0]  %s1, 64, %s27, [#allocation6]
    $region9: #{tpu_custom_call.1} parent=1 // pred_fallthru
      _
    // Predicated region
    $region10: #{tpu_custom_call.1} parent=1 // pred_check
      _
    $region11: #{tpu_custom_call.1} parent=1 // pred_check_branch
      %31 = sbr.rel (0) target = $region13
    $region12: #{tpu_custom_call.1} parent=1 // pred_region
      %32 = dma.done [#allocation3], 128
    $region13: #{tpu_custom_call.1} parent=1 // pred_fallthru
      _
    // Predicated region
    $region14: #{tpu_custom_call.1} parent=1 // pred_check
      _
    $region15: #{tpu_custom_call.1} parent=1 // pred_check_branch
      %34 = sbr.rel (0) target = $region17
    $region16: #{tpu_custom_call.1} parent=1 // pred_region
      %35 = dma.done [#allocation6], 64
    $region17: #{tpu_custom_call.1} parent=1 // pred_fallthru
      _
    %v36 = vld [vmem:[#allocation2] sm:$0xff]
    %v38 = vcombine.high %v36, %v36
    %vm40 = vcmask 1043456
    %v41 = vsel %vm40, %v36, 0.0
    %v42 = vsel %vm40, %v38, 0.0
    %v43 = vadd.f32 %v41, %v42
    %44 = vadd.xlane.f32.xlu0 %v43
    %v45 = vpop.xlane.xlu0 %44
    %v46 = vrcp.pop 256.0
    %v47 = vmul.f32 %v45, %v46
    %v48 = vld [vmem:[#allocation5] sm:$0xf]
    %49 = vxpose.xlu0.b32.start [1/16] %v47, 128
    %50 = vxpose.xlu0.b32.cont [2/16] 0.0, 128
    %51 = vxpose.xlu0.b32.cont [3/16] 0.0, 128
    %52 = vxpose.xlu0.b32.cont [4/16] 0.0, 128
    %53 = vxpose.xlu0.b32.cont [5/16] 0.0, 128
    %54 = vxpose.xlu0.b32.cont [6/16] 0.0, 128
    %55 = vxpose.xlu0.b32.cont [7/16] 0.0, 128
    %56 = vxpose.xlu0.b32.cont [8/16] 0.0, 128
    %57 = vxpose.xlu0.b32.cont [9/16] 0.0, 128
    %58 = vxpose.xlu0.b32.cont [10/16] 0.0, 128
    %59 = vxpose.xlu0.b32.cont [11/16] 0.0, 128
    %60 = vxpose.xlu0.b32.cont [12/16] 0.0, 128
    %61 = vxpose.xlu0.b32.cont [13/16] 0.0, 128
    %62 = vxpose.xlu0.b32.cont [14/16] 0.0, 128
    %63 = vxpose.xlu0.b32.cont [15/16] 0.0, 128
    %64 = vxpose.xlu0.b32.end [16/16] 0.0, 128
    %v65 = vpop.trf.xlu0
    %v66 = vpop.trf.xlu0
    %v67 = vpop.trf.xlu0
    %v68 = vpop.trf.xlu0
    %v69 = vpop.trf.xlu0
    %v70 = vpop.trf.xlu0
    %v71 = vpop.trf.xlu0
    %v72 = vpop.trf.xlu0
    %v73 = vpop.trf.xlu0
    %v74 = vpop.trf.xlu0
    %v75 = vpop.trf.xlu0
    %v76 = vpop.trf.xlu0
    %v77 = vpop.trf.xlu0
    %v78 = vpop.trf.xlu0
    %v79 = vpop.trf.xlu0
    %v80 = vpop.trf.xlu0
    %vm81 = vcmask 31744
    %v83 = vsel %vm81, %v65, 0
    %v86 = vsel %vm40, %v48, 0
    %88 = vmatprep.subr.mxu0 0.0
    %89 = vmatpush1.msra.mxu0 %v86
    %90 = vmatprep.subr.mxu0 0.0
    %91 = vmatpush1.msra.mxu0 0.0
    %92 = vmatprep.subr.mxu0 0.0
    %93 = vmatpush1.msra.mxu0 0.0
    %94 = vmatprep.subr.mxu0 0.0
    %95 = vmatpush1.msra.mxu0 0.0
    %96 = vmatprep.subr.mxu0 0.0
    %97 = vmatpush1.msra.mxu0 0.0
    %98 = vmatprep.subr.mxu0 0.0
    %99 = vmatpush1.msra.mxu0 0.0
    %100 = vmatprep.subr.mxu0 0.0
    %101 = vmatpush1.msra.mxu0 0.0
    %102 = vmatprep.subr.mxu0 0.0
    %103 = vmatpush1.msra.mxu0 0.0
    %104 = vmatprep.subr.mxu0 0.0
    %105 = vmatpush1.msra.mxu0 0.0
    %106 = vmatprep.subr.mxu0 0.0
    %107 = vmatpush1.msra.mxu0 0.0
    %108 = vmatprep.subr.mxu0 0.0
    %109 = vmatpush1.msra.mxu0 0.0
    %110 = vmatprep.subr.mxu0 0.0
    %111 = vmatpush1.msra.mxu0 0.0
    %112 = vmatprep.subr.mxu0 0.0
    %113 = vmatpush1.msra.mxu0 0.0
    %114 = vmatprep.subr.mxu0 0.0
    %115 = vmatpush1.msra.mxu0 0.0
    %116 = vmatprep.subr.mxu0 0.0
    %117 = vmatpush1.msra.mxu0 0.0
    %118 = vmatprep.subr.mxu0 0.0
    %119 = vmatpush1.msra.mxu0 0.0
    %120 = vmatprep.subr.mxu0 0.0
    %121 = vmatpush1.msra.mxu0 0.0
    %122 = vmatprep.subr.mxu0 0.0
    %123 = vmatpush1.msra.mxu0 0.0
    %124 = vmatprep.subr.mxu0 0.0
    %125 = vmatpush1.msra.mxu0 0.0
    %126 = vmatprep.subr.mxu0 0.0
    %127 = vmatpush1.msra.mxu0 0.0
    %128 = vmatprep.subr.mxu0 0.0
    %129 = vmatpush1.msra.mxu0 0.0
    %130 = vmatprep.subr.mxu0 0.0
    %131 = vmatpush1.msra.mxu0 0.0
    %132 = vmatprep.subr.mxu0 0.0
    %133 = vmatpush1.msra.mxu0 0.0
    %134 = vmatprep.subr.mxu0 0.0
    %135 = vmatpush1.msra.mxu0 0.0
    %136 = vmatprep.subr.mxu0 0.0
    %137 = vmatpush1.msra.mxu0 0.0
    %138 = vmatprep.subr.mxu0 0.0
    %139 = vmatpush1.msra.mxu0 0.0
    %140 = vmatprep.subr.mxu0 0.0
    %141 = vmatpush1.msra.mxu0 0.0
    %142 = vmatprep.subr.mxu0 0.0
    %143 = vmatpush1.msra.mxu0 0.0
    %144 = vmatprep.subr.mxu0 0.0
    %145 = vmatpush1.msra.mxu0 0.0
    %146 = vmatprep.subr.mxu0 0.0
    %147 = vmatpush1.msra.mxu0 0.0
    %148 = vmatprep.subr.mxu0 0.0
    %149 = vmatpush1.msra.mxu0 0.0
    %150 = vmatprep.subr.mxu0 0.0
    %151 = vmatpush1.msra.mxu0 0.0
    %152 = vmatprep.mubr.f32.mxu0 0.0
    %153 = vmatmul.mubr.f32.gmra.mrb[0].mxu0 %v83
    %v154 = vpop.f32.mrb[0].mxu0
    %v155 = vadd.f32 0.0, %v154
    %v156 = vpop.f32.mrb[0].mxu0
    %157 = vdwg.mxu0
    %v158 = vmul.f32 %v155, %v155
    %vm159 = vcmask 1040384
    %v160 = vsel %vm159, %v158, 0.0
    %161 = vadd.xlane.f32.xlu0 %v160
    %v162 = vpop.xlane.xlu0 %161
    %v163 = vmax.f32 %v162, 1e-16
    %v164 = vrsqrt.pop %v163
    %v165 = vmul.f32 %v155, %v164
    %166 = vst [vmem:[#allocation7] sm:$0x1] %v165
    // Predicated region
    $region18: #{tpu_custom_call.1} parent=1 // pred_check
      _
    $region19: #{tpu_custom_call.1} parent=1 // pred_check_branch
      %168 = sbr.rel (0) target = $region21
    $region20: #{tpu_custom_call.1} parent=1 // pred_region
      %s170 = ssub.s32 16, 16
      %171 = vsyncadd [#allocation4], %s170
      %s173 = sshll.u32 [#allocation7], 4
      %s174 = int_to_ptr.vmem [resolvable:$true] %s173
      %176 = dma.vmem_to_hbm [thread:$0]  %s174, 16, %s2, [#allocation4]
    $region21: #{tpu_custom_call.1} parent=1 // pred_fallthru
      _
    // Predicated region
    $region22: #{tpu_custom_call.1} parent=1 // pred_check
      _
    $region23: #{tpu_custom_call.1} parent=1 // pred_check_branch
      %178 = sbr.rel (0) target = $region25
    $region24: #{tpu_custom_call.1} parent=1 // pred_region
      %179 = dma.done [#allocation4], 16
    $region25: #{tpu_custom_call.1} parent=1 // pred_fallthru
      _
    %180 = vsyncpa [#allocation3], 1
    %181 = vsyncpa [#allocation6], 1
    %182 = vsyncpa [#allocation4], 1

</llo_original>
